<compile_context>
chip_gen: v7x
topology: tpu7x:2x2x1
jax: 0.10.0
libtpu: 0.0.40
codegen_flags: <defaults>
</compile_context>

<pallas_src>
import jax
import jax.numpy as jnp
import numpy as np
from jax.experimental import pallas as pl
from jax.experimental.pallas import tpu as pltpu


def _round_up(x, m):
    return ((x + m - 1) // m) * m


def _make_conv_kernel(K, C_idx, Ws, Hout, H, pv, ph, FM):
    """K x K valid cross-correlation on a row-flattened plane (row stride Ws).

    Per grid step (one image):
      1. zero-fill a VMEM scratch and store the selected channel at the
         128-lane-aligned offset FM (the zero margins realize the *vertical*
         zero padding),
      2. accumulate the K*K taps as unaligned ref-slice loads of the scratch
         (realignment rides the vld slots, not the VALU/XLU),
      3. when ph > 0, mask the taps whose column offset wrapped across a row
         boundary (that is the *horizontal* zero padding),
      4. store one lane-dense flat output row.
    """
    Lin = H * Ws          # flattened input plane length
    Lwide = Hout * Ws     # flattened output length (row stride Ws)

    def kernel(kern_ref, col_ref, x_ref, o_ref, buf_ref):
        # kern_ref: (K*K,)         f32 in SMEM (scalar tap weights).
        # col_ref : (1, Lwide)     i32 in VMEM (output column index m % Ws).
        # x_ref   : (1, Cin, Lin)  f32 in VMEM (flattened input planes).
        # o_ref   : (1, 1, Lwide)  f32 in VMEM (flat, lane-dense output).
        # buf_ref : (1, BUFLEN)    f32 VMEM scratch (zero-margined plane).

        # Fused zero-pad: the scratch margins are the vertical padding.
        buf_ref[...] = jnp.zeros(buf_ref.shape, buf_ref.dtype)
        # Fused channel select: only channel C_idx is ever consumed by the
        # reference forward (its channel loop overwrites `conv_img`).
        buf_ref[:, FM:FM + Lin] = x_ref[:, C_idx, :]

        col = col_ref[...] if ph > 0 else None
        acc = None
        for i in range(K):            # unrolled K*K tap accumulation
            for j in range(K):
                dj = j - ph
                off = FM + (i - pv) * Ws + dj
                # Unaligned load-side slice (review option #2): realignment on
                # the near-idle vld slots instead of K*K in-register shifts.
                tap = buf_ref[:, off:off + Lwide]
                if ph > 0 and dj != 0:
                    # Horizontal border: zero values that wrapped across rows.
                    ok = (col >= -dj) if dj < 0 else (col < Ws - dj)
                    tap = jnp.where(ok, tap, 0.0)
                term = kern_ref[i * K + j] * tap
                acc = term if acc is None else acc + term   # first-tap init
        o_ref[...] = acc[:, None, :]

    return kernel


def _conv_planes(x_planes, kernel, *, Ws, Hout, pv, ph):
    """Runs the Pallas kernel on (B, Cin, H*Ws) planes -> (B, Hout, Ws)."""
    B, Cin, Lin = x_planes.shape
    H = Lin // Ws
    K = kernel.shape[0]
    Lwide = Hout * Ws
    FM = _round_up(pv * Ws + ph, 128)            # lane-aligned interior offset
    BUFLEN = FM + (H + pv) * Ws + (K - 1 - ph)   # front margin + plane + slack

    if ph > 0:
        # Output column index (m % Ws), baked as a host constant so no
        # integer div/rem is needed in-kernel and no extra XLA op is emitted.
        col = np.tile(np.arange(Ws, dtype=np.int32), Hout)[None]
    else:
        col = np.zeros((1, Lwide), np.int32)     # unused when ph == 0

    # TODO(synk): when H*W grows, tile Hout into strips via the grid (each
    # strip gets its own K-1-row halo in the scratch) and fold >=8 rows into
    # the sublane dim for VALU/store utilization; size strips for v7x's
    # 64 MiB VMEM with an explicit vmem_limit_bytes, while v5e/v6e (128 MiB)
    # can take much larger blocks.  At 16x16 one whole plane per step is best.
    out = pl.pallas_call(
        _make_conv_kernel(K, Cin - 1, Ws, Hout, H, pv, ph, FM),
        out_shape=jax.ShapeDtypeStruct((B, 1, Lwide), jnp.float32),
        grid=(B,),                               # one image per step; both
        in_specs=[                               # v7x TensorCores participate.
            # Flat (K*K,) weight table lives whole in SMEM for scalar reads.
            pl.BlockSpec(memory_space=pltpu.MemorySpace.SMEM),
            pl.BlockSpec((1, Lwide), lambda b: (0, 0)),
            pl.BlockSpec((1, Cin, Lin), lambda b: (b, 0, 0)),
        ],
        out_specs=pl.BlockSpec((1, 1, Lwide), lambda b: (b, 0, 0)),
        scratch_shapes=[pltpu.VMEM((1, BUFLEN), jnp.float32)],
        compiler_params=pltpu.CompilerParams(
            dimension_semantics=("parallel",)),
    )(kernel.reshape(-1).astype(jnp.float32), jnp.asarray(col), x_planes)

    return out.reshape(B, Hout, Ws)              # contiguous -> free reshape


def conv_forward(x, kernel, padding=True):
    """Forward pass of the `Conv` module. x: (B, C, H, W) NCHW."""
    B, C, H, W = x.shape
    K = kernel.shape[0]
    p = (K // 2) if padding else 0               # nn.ZeroPad2d(K // 2)
    Hout = H + 2 * p - (K - 1)
    Wout = W + 2 * p - (K - 1)

    xf = x.astype(jnp.float32)

    if padding and K % 2 == 1:
        # Default config, fully fused: no wrapper pad, output row stride ==
        # Wout, so only free reshapes surround the single pallas_call.
        planes = xf.reshape(B, C, H * W)
        conv = _conv_planes(planes, kernel, Ws=W, Hout=Hout, pv=p, ph=p)
        # Ws == Wout here, so `conv` is already (B, Hout, Wout).
    else:
        # Rare configs (padding=False, or even K): horizontal padding (if
        # any) is materialized in the wrapper and the K-1 slack columns of
        # each wide output row are sliced off afterwards.
        # TODO(synk): fold these two ops into the kernel too (per-row copies
        # into/out of the VMEM scratch) if such configs ever become hot.
        xs = xf[:, -1]                            # (B, H, W): last channel
        if p:
            xs = jnp.pad(xs, ((0, 0), (0, 0), (p, p)))
        Ws = W + 2 * p
        planes = xs.reshape(B, 1, H * Ws)
        wide = _conv_planes(planes, kernel, Ws=Ws, Hout=Hout, pv=p, ph=0)
        conv = wide[:, :, :Wout]

    # Reproduce the reference exactly: the LAST channel's convolution is
    # broadcast over all C output channels.
    # TODO(synk): the module's `stride` ctor arg is never used in its forward
    # pass (the window always slides by 1), so it is intentionally not exposed.
    return jnp.broadcast_to(conv[:, None, :, :], (B, C, Hout, Wout))


if __name__ == "__main__":
    key = jax.random.PRNGKey(0)
    k_x, k_w = jax.random.split(key)

    B, C, H, W = 2, 4, 16, 16
    kernel_size = 3

    x = jax.random.normal(k_x, (B, C, H, W), dtype=jnp.float32)
    # torch.randint(0, 2, (K, K), dtype=torch.float): binary 0/1 kernel.
    kernel = jax.random.randint(
        k_w, (kernel_size, kernel_size), 0, 2).astype(jnp.float32)

    def ref_forward(x, kernel, padding=True):
        # Pure-JAX reference of the module's forward (incl. channel-overwrite).
        Kk = kernel.shape[0]
        pp = Kk // 2 if padding else 0
        img = jnp.pad(x[:, -1], ((0, 0), (pp, pp), (pp, pp)))
        Ho = img.shape[1] - (Kk - 1)
        Wo = img.shape[2] - (Kk - 1)
        out = jnp.zeros((x.shape[0], Ho, Wo), jnp.float32)
        for i in range(Kk):
            for j in range(Kk):
                out = out + kernel[i, j] * img[:, i:i + Ho, j:j + Wo]
        return jnp.broadcast_to(out[:, None], (x.shape[0], x.shape[1], Ho, Wo))

    # Default config (padding=True, odd K): fully fused fast path.
    out = jax.block_until_ready(conv_forward(x, kernel, padding=True))
    assert out.shape == (B, C, H, W), out.shape
    assert out.dtype == jnp.float32
    ref = ref_forward(x, kernel, padding=True)
    assert bool(jnp.allclose(out, ref, atol=1e-5, rtol=1e-5)), \
        float(jnp.max(jnp.abs(out - ref)))

    # padding=False exercises the general (slack-column) path of the kernel.
    out_np = jax.block_until_ready(conv_forward(x, kernel, padding=False))
    ref_np = ref_forward(x, kernel, padding=False)
    assert out_np.shape == ref_np.shape, (out_np.shape, ref_np.shape)
    assert bool(jnp.allclose(out_np, ref_np, atol=1e-5, rtol=1e-5)), \
        float(jnp.max(jnp.abs(out_np - ref_np)))

    print("KERNEL_OK")
</pallas_src>

<mosaic_0001>
module attributes {stable_mosaic.version = 11 : i64} {
  func.func @kernel(%arg0: i32, %arg1: memref<9xf32, #tpu.memory_space<smem>>, %arg2: memref<1x256xi32, #tpu.memory_space<vmem>>, %arg3: memref<1x4x256xf32, #tpu.memory_space<vmem>>, %arg4: memref<1x1x256xf32, #tpu.memory_space<vmem>>, %arg5: memref<1x401xf32, #tpu.memory_space<vmem>>) attributes {dimension_semantics = [#tpu.dimension_semantics<parallel>], iteration_bounds = array<i64: 2>, scalar_prefetch = 0 : i64, scratch_operands = 1 : i64, tpu.core_type = #tpu.core_type<tc>, window_params = [{transform_indices = @transform_0, window_bounds = array<i64: 9>}, {pipeline_mode = #tpu.pipeline_mode<synchronous>, transform_indices = @transform_1, window_bounds = array<i64: 1, 256>}, {transform_indices = @transform_2, window_bounds = array<i64: 1, 4, 256>}, {transform_indices = @transform_3, window_bounds = array<i64: 1, 1, 256>}]} {
    %cst = arith.constant 0.000000e+00 : f32
    %0 = vector.broadcast %cst : f32 to vector<1x401xf32>
    %c0 = arith.constant 0 : index
    %c0_0 = arith.constant 0 : index
    %1 = vector.load %arg5[%c0, %c0_0] : memref<1x401xf32, #tpu.memory_space<vmem>>, vector<1x401xf32>
    tpu.vector_store %arg5[%c0, %c0_0], %0 {strides = array<i32>} : memref<1x401xf32, #tpu.memory_space<vmem>>, vector<1x401xf32>,
    %c0_1 = arith.constant 0 : index
    %c3 = arith.constant 3 : index
    %c0_2 = arith.constant 0 : index
    %2 = vector.load %arg3[%c0_1, %c3, %c0_2] : memref<1x4x256xf32, #tpu.memory_space<vmem>>, vector<1x1x256xf32>
    %3 = vector.shape_cast %2 : vector<1x1x256xf32> to vector<1x256xf32>
    %c0_3 = arith.constant 0 : index
    %c128 = arith.constant 128 : index
    %4 = vector.load %arg5[%c0_3, %c128] : memref<1x401xf32, #tpu.memory_space<vmem>>, vector<1x256xf32>
    tpu.vector_store %arg5[%c0_3, %c128], %3 {strides = array<i32>} : memref<1x401xf32, #tpu.memory_space<vmem>>, vector<1x256xf32>,
    %c0_4 = arith.constant 0 : index
    %c0_5 = arith.constant 0 : index
    %5 = vector.load %arg2[%c0_4, %c0_5] : memref<1x256xi32, #tpu.memory_space<vmem>>, vector<1x256xi32>
    %c0_6 = arith.constant 0 : index
    %c111 = arith.constant 111 : index
    %6 = vector.load %arg5[%c0_6, %c111] : memref<1x401xf32, #tpu.memory_space<vmem>>, vector<1x256xf32>
    %c1_i32 = arith.constant 1 : i32
    %7 = vector.broadcast %c1_i32 : i32 to vector<1x256xi32>
    %8 = arith.cmpi sge, %5, %7 : vector<1x256xi32>
    %cst_7 = arith.constant 0.000000e+00 : f32
    %9 = vector.broadcast %cst_7 : f32 to vector<1x256xf32>
    %10 = arith.select %8, %6, %9 : vector<1x256xi1>, vector<1x256xf32>
    %c0_8 = arith.constant 0 : index
    %11 = memref.load %arg1[%c0_8] : memref<9xf32, #tpu.memory_space<smem>>
    %12 = vector.broadcast %11 : f32 to vector<1x256xf32>
    %13 = arith.mulf %12, %10 : vector<1x256xf32>
    %c0_9 = arith.constant 0 : index
    %c112 = arith.constant 112 : index
    %14 = vector.load %arg5[%c0_9, %c112] : memref<1x401xf32, #tpu.memory_space<vmem>>, vector<1x256xf32>
    %c1 = arith.constant 1 : index
    %15 = memref.load %arg1[%c1] : memref<9xf32, #tpu.memory_space<smem>>
    %16 = vector.broadcast %15 : f32 to vector<1x256xf32>
    %17 = arith.mulf %16, %14 : vector<1x256xf32>
    %18 = arith.addf %13, %17 : vector<1x256xf32>
    %c0_10 = arith.constant 0 : index
    %c113 = arith.constant 113 : index
    %19 = vector.load %arg5[%c0_10, %c113] : memref<1x401xf32, #tpu.memory_space<vmem>>, vector<1x256xf32>
    %c15_i32 = arith.constant 15 : i32
    %20 = vector.broadcast %c15_i32 : i32 to vector<1x256xi32>
    %21 = arith.cmpi slt, %5, %20 : vector<1x256xi32>
    %cst_11 = arith.constant 0.000000e+00 : f32
    %22 = vector.broadcast %cst_11 : f32 to vector<1x256xf32>
    %23 = arith.select %21, %19, %22 : vector<1x256xi1>, vector<1x256xf32>
    %c2 = arith.constant 2 : index
    %24 = memref.load %arg1[%c2] : memref<9xf32, #tpu.memory_space<smem>>
    %25 = vector.broadcast %24 : f32 to vector<1x256xf32>
    %26 = arith.mulf %25, %23 : vector<1x256xf32>
    %27 = arith.addf %18, %26 : vector<1x256xf32>
    %c0_12 = arith.constant 0 : index
    %c127 = arith.constant 127 : index
    %28 = vector.load %arg5[%c0_12, %c127] : memref<1x401xf32, #tpu.memory_space<vmem>>, vector<1x256xf32>
    %c1_i32_13 = arith.constant 1 : i32
    %29 = vector.broadcast %c1_i32_13 : i32 to vector<1x256xi32>
    %30 = arith.cmpi sge, %5, %29 : vector<1x256xi32>
    %cst_14 = arith.constant 0.000000e+00 : f32
    %31 = vector.broadcast %cst_14 : f32 to vector<1x256xf32>
    %32 = arith.select %30, %28, %31 : vector<1x256xi1>, vector<1x256xf32>
    %c3_15 = arith.constant 3 : index
    %33 = memref.load %arg1[%c3_15] : memref<9xf32, #tpu.memory_space<smem>>
    %34 = vector.broadcast %33 : f32 to vector<1x256xf32>
    %35 = arith.mulf %34, %32 : vector<1x256xf32>
    %36 = arith.addf %27, %35 : vector<1x256xf32>
    %c0_16 = arith.constant 0 : index
    %c128_17 = arith.constant 128 : index
    %37 = vector.load %arg5[%c0_16, %c128_17] : memref<1x401xf32, #tpu.memory_space<vmem>>, vector<1x256xf32>
    %c4 = arith.constant 4 : index
    %38 = memref.load %arg1[%c4] : memref<9xf32, #tpu.memory_space<smem>>
    %39 = vector.broadcast %38 : f32 to vector<1x256xf32>
    %40 = arith.mulf %39, %37 : vector<1x256xf32>
    %41 = arith.addf %36, %40 : vector<1x256xf32>
    %c0_18 = arith.constant 0 : index
    %c129 = arith.constant 129 : index
    %42 = vector.load %arg5[%c0_18, %c129] : memref<1x401xf32, #tpu.memory_space<vmem>>, vector<1x256xf32>
    %c15_i32_19 = arith.constant 15 : i32
    %43 = vector.broadcast %c15_i32_19 : i32 to vector<1x256xi32>
    %44 = arith.cmpi slt, %5, %43 : vector<1x256xi32>
    %cst_20 = arith.constant 0.000000e+00 : f32
    %45 = vector.broadcast %cst_20 : f32 to vector<1x256xf32>
    %46 = arith.select %44, %42, %45 : vector<1x256xi1>, vector<1x256xf32>
    %c5 = arith.constant 5 : index
    %47 = memref.load %arg1[%c5] : memref<9xf32, #tpu.memory_space<smem>>
    %48 = vector.broadcast %47 : f32 to vector<1x256xf32>
    %49 = arith.mulf %48, %46 : vector<1x256xf32>
    %50 = arith.addf %41, %49 : vector<1x256xf32>
    %c0_21 = arith.constant 0 : index
    %c143 = arith.constant 143 : index
    %51 = vector.load %arg5[%c0_21, %c143] : memref<1x401xf32, #tpu.memory_space<vmem>>, vector<1x256xf32>
    %c1_i32_22 = arith.constant 1 : i32
    %52 = vector.broadcast %c1_i32_22 : i32 to vector<1x256xi32>
    %53 = arith.cmpi sge, %5, %52 : vector<1x256xi32>
    %cst_23 = arith.constant 0.000000e+00 : f32
    %54 = vector.broadcast %cst_23 : f32 to vector<1x256xf32>
    %55 = arith.select %53, %51, %54 : vector<1x256xi1>, vector<1x256xf32>
    %c6 = arith.constant 6 : index
    %56 = memref.load %arg1[%c6] : memref<9xf32, #tpu.memory_space<smem>>
    %57 = vector.broadcast %56 : f32 to vector<1x256xf32>
    %58 = arith.mulf %57, %55 : vector<1x256xf32>
    %59 = arith.addf %50, %58 : vector<1x256xf32>
    %c0_24 = arith.constant 0 : index
    %c144 = arith.constant 144 : index
    %60 = vector.load %arg5[%c0_24, %c144] : memref<1x401xf32, #tpu.memory_space<vmem>>, vector<1x256xf32>
    %c7 = arith.constant 7 : index
    %61 = memref.load %arg1[%c7] : memref<9xf32, #tpu.memory_space<smem>>
    %62 = vector.broadcast %61 : f32 to vector<1x256xf32>
    %63 = arith.mulf %62, %60 : vector<1x256xf32>
    %64 = arith.addf %59, %63 : vector<1x256xf32>
    %c0_25 = arith.constant 0 : index
    %c145 = arith.constant 145 : index
    %65 = vector.load %arg5[%c0_25, %c145] : memref<1x401xf32, #tpu.memory_space<vmem>>, vector<1x256xf32>
    %c15_i32_26 = arith.constant 15 : i32
    %66 = vector.broadcast %c15_i32_26 : i32 to vector<1x256xi32>
    %67 = arith.cmpi slt, %5, %66 : vector<1x256xi32>
    %cst_27 = arith.constant 0.000000e+00 : f32
    %68 = vector.broadcast %cst_27 : f32 to vector<1x256xf32>
    %69 = arith.select %67, %65, %68 : vector<1x256xi1>, vector<1x256xf32>
    %c8 = arith.constant 8 : index
    %70 = memref.load %arg1[%c8] : memref<9xf32, #tpu.memory_space<smem>>
    %71 = vector.broadcast %70 : f32 to vector<1x256xf32>
    %72 = arith.mulf %71, %69 : vector<1x256xf32>
    %73 = arith.addf %64, %72 : vector<1x256xf32>
    %74 = vector.shape_cast %73 : vector<1x256xf32> to vector<1x1x256xf32>
    %c0_28 = arith.constant 0 : index
    %c0_29 = arith.constant 0 : index
    %c0_30 = arith.constant 0 : index
    %75 = vector.load %arg4[%c0_28, %c0_29, %c0_30] : memref<1x1x256xf32, #tpu.memory_space<vmem>>, vector<1x1x256xf32>
    tpu.vector_store %arg4[%c0_28, %c0_29, %c0_30], %74 {strides = array<i32>} : memref<1x1x256xf32, #tpu.memory_space<vmem>>, vector<1x1x256xf32>,
    return
  }
  func.func @transform_0(%arg0: i32) -> i32 {
    %c0_i32 = arith.constant 0 : i32
    %c0_i32_0 = arith.constant 0 : i32
    return %c0_i32 : i32
  }
  func.func @transform_1(%arg0: i32) -> (i32, i32) {
    %c0_i32 = arith.constant 0 : i32
    %c0_i32_0 = arith.constant 0 : i32
    %c0_i32_1 = arith.constant 0 : i32
    return %c0_i32, %c0_i32_0 : i32, i32
  }
  func.func @transform_2(%arg0: i32) -> (i32, i32, i32) {
    %c0_i32 = arith.constant 0 : i32
    %c0_i32_0 = arith.constant 0 : i32
    %c0_i32_1 = arith.constant 0 : i32
    return %arg0, %c0_i32, %c0_i32_0 : i32, i32, i32
  }
  func.func @transform_3(%arg0: i32) -> (i32, i32, i32) {
    %c0_i32 = arith.constant 0 : i32
    %c0_i32_0 = arith.constant 0 : i32
    %c0_i32_1 = arith.constant 0 : i32
    return %arg0, %c0_i32, %c0_i32_0 : i32, i32, i32
  }
}

</mosaic_0001>

<llo_original>
// kernel: tpu_custom_call.1
$region0: #{tpu_custom_call.1}
  #allocation0 [shape = 'u32[]', space=smem, size = 0x4, offset = 0x4, fixed_abs, tag = 'smem constant byte address 0x4 - core index']
  #allocation1 [shape = 'u32[144,128]{1,0:T(1,128)}', space=vmem, size = 0x12000, scoped, tag = 'internal scratch']
  #allocation2 [shape = 'f32[1,401]{1,0:T(1,128)}', space=vmem, size = 0x800, scoped, tag = 'scratch operand']
  %s0 = inlined_call_operand.hbm [shape: f32[9], index: 0, kind: input, shape index: {}]
  %s1 = inlined_call_operand.vmem [shape: s32[1,256], index: 1, kind: input, shape index: {}]
  %s2 = inlined_call_operand.hbm [shape: f32[2,4,256], index: 2, kind: input, shape index: {}]
  %s3 = inlined_call_operand.hbm [shape: f32[2,1,256], index: 3, kind: output, shape index: {}]
  %s4 = sld [smem:[#allocation0]]
  $region53: #{tpu_custom_call.1} parent=0
    _
  %s6 = ssub.s32 1, %s4
  %s7 = scalar_select 0, %s6, %s4
  $region1: #{tpu_custom_call.1} parent=0
    #allocation3 [shape = 'u8[512]{0}', space=smem, size = 0x200, scoped, tag = 'input window, operand 0, single buffered']
    #allocation4 [shape = 's32[2]{0}', space=sflag, size = 0x8, scoped, tag = 'scoped memory for tpu_custom_call.1']
    #allocation5 [shape = 's32[2]{0}', space=sflag, size = 0x8, scoped, tag = 'scoped memory for tpu_custom_call.1']
    #allocation6 [shape = 's32[2]{0}', space=sflag, size = 0x8, scoped, tag = 'scoped memory for tpu_custom_call.1']
    #allocation7 [shape = 'u8[8192]{0}', space=vmem, size = 0x2000, scoped, tag = 'input window, operand 2']
    #allocation8 [shape = 'u8[2048]{0}', space=vmem, size = 0x800, scoped, tag = 'output window, operand 0']
    %8 = vsyncpa [#allocation6], 0
    %9 = vsyncpa [#allocation4], 0
    %s10 = scalar_lea.sflag [#allocation4], 1
    %11 = vsyncpa %s10, 0
    %12 = vsyncpa [#allocation5], 0
    %s13 = scalar_lea.sflag [#allocation5], 1
    %14 = vsyncpa %s13, 0
    loop: start=0, step=1, limit=4
    $region2: #{tpu_custom_call.1} parent=1 // loop_pre_header
      _
    $region3: #{tpu_custom_call.1} parent=1 // loop_header
      %s16 = sphi 0, %s20
      %p17 = scmp.ge.s32.totalorder %s16, 4
      %s24 = sphi 0, %s24
      %s26 = sphi 0, %s24
      %s27 = sphi 0, %s26
      %s41 = sphi 0, %s27
      %s45 = sphi 0, %s45
      %s47 = sphi 0, %s45
      %s48 = sphi 0, %s47
      %s62 = sphi 0, %s48
      %s68 = sphi 0, %s70
      %s71 = sphi 0, %s68
      %s72 = sphi 0, %s71
      %s88 = sphi 0, %s72
      %s94 = sphi 0, %s96
      %s97 = sphi 0, %s94
      %s98 = sphi 0, %s97
      %s114 = sphi 0, %s98
    $region4: #{tpu_custom_call.1} parent=1 // loop_header_branch
      %19 = sbr.rel (%p17) target = $region8
    $region5: #{tpu_custom_call.1} parent=1 // loop_body
      %s21 = ssub.s32 %s16, 1
      %s22 = ssub.s32 %s16, 2
      %s23 = sadd.s32 %s16, 1
      %s25 = sadd.s32 %s24, 1
      %p28 = scmp.eq.s32.totalorder %s16, 1
      %p29 = scmp.ne.s32.totalorder %s24, %s26
      %p30 = scmp.eq.s32.totalorder %s16, 0
      %p31 = por %p29, %p30
      %p32 = scmp.ne.s32.totalorder %s24, %s26
      %p33 = scmp.eq.s32.totalorder %s21, 1
      %p34 = por %p32, %p33
      %p35 = scmp.ne.s32.totalorder %s26, %s27
      %p36 = scmp.eq.s32.totalorder %s21, 0
      %p37 = por %p35, %p36
      %p38 = scmp.ne.s32.totalorder %s26, %s27
      %p39 = scmp.eq.s32.totalorder %s22, 1
      %p40 = por %p38, %p39
      %p42 = scmp.ne.s32.totalorder %s27, %s41
      %p43 = scmp.eq.s32.totalorder %s22, 0
      %p44 = por %p42, %p43
      %s46 = sadd.s32 %s45, 1
      %p49 = scmp.eq.s32.totalorder %s16, 1
      %p50 = scmp.ne.s32.totalorder %s45, %s47
      %p51 = scmp.eq.s32.totalorder %s16, 0
      %p52 = por %p50, %p51
      %p53 = scmp.ne.s32.totalorder %s45, %s47
      %p54 = scmp.eq.s32.totalorder %s21, 1
      %p55 = por %p53, %p54
      %p56 = scmp.ne.s32.totalorder %s47, %s48
      %p57 = scmp.eq.s32.totalorder %s21, 0
      %p58 = por %p56, %p57
      %p59 = scmp.ne.s32.totalorder %s47, %s48
      %p60 = scmp.eq.s32.totalorder %s22, 1
      %p61 = por %p59, %p60
      %p63 = scmp.ne.s32.totalorder %s48, %s62
      %p64 = scmp.eq.s32.totalorder %s22, 0
      %p65 = por %p63, %p64
      %s66 = ssub.s32 %s16, %s23
      %p67 = scmp.eq.s32.totalorder %s66, 0
      %s69 = sadd.s32 %s68, 1
      %s70 = scalar_select %p67, %s68, %s69
      %p73 = pneg %p67
      %p74 = scmp.eq.s32.totalorder %s16, 1
      %p75 = por %p73, %p74
      %p76 = scmp.ne.s32.totalorder %s68, %s71
      %p77 = scmp.eq.s32.totalorder %s16, 0
      %p78 = por %p76, %p77
      %p79 = scmp.ne.s32.totalorder %s68, %s71
      %p80 = scmp.eq.s32.totalorder %s21, 1
      %p81 = por %p79, %p80
      %p82 = scmp.ne.s32.totalorder %s71, %s72
      %p83 = scmp.eq.s32.totalorder %s21, 0
      %p84 = por %p82, %p83
      %p85 = scmp.ne.s32.totalorder %s71, %s72
      %p86 = scmp.eq.s32.totalorder %s22, 1
      %p87 = por %p85, %p86
      %p89 = scmp.ne.s32.totalorder %s72, %s88
      %p90 = scmp.eq.s32.totalorder %s22, 0
      %p91 = por %p89, %p90
      %s92 = ssub.s32 %s16, %s23
      %p93 = scmp.eq.s32.totalorder %s92, 0
      %s95 = sadd.s32 %s94, 1
      %s96 = scalar_select %p93, %s94, %s95
      %p99 = pneg %p93
      %p100 = scmp.eq.s32.totalorder %s16, 1
      %p101 = por %p99, %p100
      %p102 = scmp.ne.s32.totalorder %s94, %s97
      %p103 = scmp.eq.s32.totalorder %s16, 0
      %p104 = por %p102, %p103
      %p105 = scmp.ne.s32.totalorder %s94, %s97
      %p106 = scmp.eq.s32.totalorder %s21, 1
      %p107 = por %p105, %p106
      %p108 = scmp.ne.s32.totalorder %s97, %s98
      %p109 = scmp.eq.s32.totalorder %s21, 0
      %p110 = por %p108, %p109
      %p111 = scmp.ne.s32.totalorder %s97, %s98
      %p112 = scmp.eq.s32.totalorder %s22, 1
      %p113 = por %p111, %p112
      %p115 = scmp.ne.s32.totalorder %s98, %s114
      %p116 = scmp.eq.s32.totalorder %s22, 0
      %p117 = por %p115, %p116
      %p118 = scmp.le.s32.totalorder 1, %s16
      %p119 = scmp.lt.s32.totalorder %s16, 3
      %p120 = pnand %p118, %p119
      %p121 = pneg %p120
      // Predicated region
      $region9: #{tpu_custom_call.1} parent=5 // pred_check
        _
      $region10: #{tpu_custom_call.1} parent=5 // pred_check_branch
        %123 = sbr.rel (%p120) target = $region12
      $region11: #{tpu_custom_call.1} parent=5 // pred_region
        %s124 = ssub.s32 %s16, 1
        // Predicated region
        $region13: #{tpu_custom_call.1} parent=11 // pred_check
          %p125 = pneg %p37
        $region14: #{tpu_custom_call.1} parent=11 // pred_check_branch
          %127 = sbr.rel (%p125) target = $region16
        $region15: #{tpu_custom_call.1} parent=11 // pred_region
          %s129 = ssub.s32 16, 16
          %130 = vsyncadd [#allocation6], %s129
          %133 = dma.hbm_to_smem %s0, 16, [#allocation3], [#allocation6]
        $region16: #{tpu_custom_call.1} parent=11 // pred_fallthru
          _
        // Predicated region
        $region17: #{tpu_custom_call.1} parent=11 // pred_check
          %p134 = pneg %p58
        $region18: #{tpu_custom_call.1} parent=11 // pred_check_branch
          %136 = sbr.rel (%p134) target = $region20
        $region19: #{tpu_custom_call.1} parent=11 // pred_region
          _
        $region20: #{tpu_custom_call.1} parent=11 // pred_fallthru
          _
      $region12: #{tpu_custom_call.1} parent=5 // pred_fallthru
        _
      %p137 = scmp.lt.s32.totalorder %s16, 2
      // Predicated region
      $region21: #{tpu_custom_call.1} parent=5 // pred_check
        %p138 = pneg %p137
      $region22: #{tpu_custom_call.1} parent=5 // pred_check_branch
        %140 = sbr.rel (%p138) target = $region24
      $region23: #{tpu_custom_call.1} parent=5 // pred_region
        // Predicated region
        $region25: #{tpu_custom_call.1} parent=23 // pred_check
          %p141 = pneg %p78
        $region26: #{tpu_custom_call.1} parent=23 // pred_check_branch
          %143 = sbr.rel (%p141) target = $region28
        $region27: #{tpu_custom_call.1} parent=23 // pred_region
          %s144 = sand.u32 %s68, 1
          %s145 = scalar_lea.sflag [#allocation4], %s144
          %s146 = sand.u32 %s68, 1
          %s147 = smul.addr %s146, 8
          %s148 = scalar_lea.vmem [#allocation7], %s147
          %s150 = ssub.s32 128, 128
          %151 = vsyncadd %s145, %s150
          %s152 = smul.addr %s16, 2
          %s153 = smul.addr %s152, 64
          %s154 = scalar_lea.hbm %s2, %s153
          %s156 = sshll.u32 %s148, 4
          %s157 = int_to_ptr.vmem [resolvable:$true] %s156
          %159 = dma.hbm_to_vmem [thread:$0]  %s154, 128, %s157, %s145
        $region28: #{tpu_custom_call.1} parent=23 // pred_fallthru
          _
      $region24: #{tpu_custom_call.1} parent=5 // pred_fallthru
        _
      %p160 = scmp.le.s32.totalorder 1, %s16
      %p161 = scmp.lt.s32.totalorder %s16, 3
      %p162 = pnand %p160, %p161
      %p163 = pneg %p162
      // Predicated region
      $region29: #{tpu_custom_call.1} parent=5 // pred_check
        _
      $region30: #{tpu_custom_call.1} parent=5 // pred_check_branch
        %165 = sbr.rel (%p162) target = $region32
      $region31: #{tpu_custom_call.1} parent=5 // pred_region
        %s166 = ssub.s32 %s16, 1
        // Predicated region
        $region33: #{tpu_custom_call.1} parent=31 // pred_check
          %p167 = pneg %p37
        $region34: #{tpu_custom_call.1} parent=31 // pred_check_branch
          %169 = sbr.rel (%p167) target = $region36
        $region35: #{tpu_custom_call.1} parent=31 // pred_region
          %170 = dma.done [#allocation6], 16
        $region36: #{tpu_custom_call.1} parent=31 // pred_fallthru
          _
        %s171 = sand.u32 %s71, 1
        %s172 = scalar_lea.sflag [#allocation4], %s171
        %s173 = sand.u32 %s71, 1
        %s174 = smul.addr %s173, 8
        %s175 = scalar_lea.vmem [#allocation7], %s174
        // Predicated region
        $region37: #{tpu_custom_call.1} parent=31 // pred_check
          %p176 = pneg %p84
        $region38: #{tpu_custom_call.1} parent=31 // pred_check_branch
          %178 = sbr.rel (%p176) target = $region40
        $region39: #{tpu_custom_call.1} parent=31 // pred_region
          %179 = dma.done %s172, 128
        $region40: #{tpu_custom_call.1} parent=31 // pred_fallthru
          _
        %180 = sfence
        %p181 = pneg %p37
        %p182 = pneg %p34
        %p183 = pneg %p58
        %p184 = pneg %p55
        %s185 = sand.u32 %s71, 1
        %s186 = scalar_lea.sflag [#allocation4], %s185
        %s187 = sand.u32 %s71, 1
        %s188 = smul.addr %s187, 8
        %s189 = scalar_lea.vmem [#allocation7], %s188
        %p190 = pneg %p84
        %p191 = pneg %p81
        %p192 = pneg %p110
        %p193 = pneg %p107
        %s194 = sand.u32 %s97, 1
        %s195 = scalar_lea.sflag [#allocation5], %s194
        %s196 = sand.u32 %s97, 1
        %s197 = smul.addr %s196, 2
        %s198 = scalar_lea.vmem [#allocation8], %s197
        %v199 = vlaneseq
        %vm200 = vcmp.ge.s32.totalorder %v199, 0
        %vm201 = vcmp.lt.s32.totalorder %v199, 401
        %vm202 = vmand %vm200, %vm201
        %203 = vst.msk [vmem:[#allocation2] sm:$0xf] %vm202, 0.0
        %s204 = scalar_lea.vmem %s175, 3 [#allocation7]
        %v205 = vld [vmem:[%s204] ss:$4 sm:$0x3]
        %vm206 = vcmp.lt.s32.totalorder %v199, 256
        %vm207 = vmand %vm200, %vm206
        %208 = vst.msk [vmem:[#allocation2 + $0x1] sm:$0x3] %vm207, %v205
        %v209 = vld [vmem:[%s1] sm:$0x3]
        %v210 = vld [vmem:[#allocation2] sm:$0x7]
        %vm211 = vcmp.ge.s32.totalorder %v209, 1
        %213 = vrot.lane.b32.xlu0 %v210, 17
        %v214 = vpop.permute.xlu0 %213
        %v215 = vrot.slane %v214, 1
        %vm216 = vcmask 138240
        %v217 = vsel %vm216, %v214, %v215
        %v219 = vsel %vm211, %v217, 0.0
        %s220 = sld [smem:[#allocation3]]
        %v221 = vstv %s220
        %v222 = vmul.f32 %v221, %v219
        %s223 = sld [smem:[#allocation3 + $0x1]]
        %v224 = vstv %s223
        %v225 = vmul.f32 %v224, %v210
        %227 = vrot.lane.b32.xlu0 %v225, 16
        %v228 = vpop.permute.xlu0 %227
        %v229 = vrot.slane %v228, 1
        %vm230 = vcmask 130048
        %v231 = vsel %vm230, %v228, %v229
        %v233 = vadd.f32 %v222, %v231
        %vm234 = vcmp.lt.s32.totalorder %v209, 15
        %235 = vrot.lane.b32.xlu0 %v210, 15
        %v236 = vpop.permute.xlu0 %235
        %v237 = vrot.slane %v236, 1
        %vm238 = vcmask 121856
        %v239 = vsel %vm238, %v236, %v237
        %v241 = vsel %vm234, %v239, 0.0
        %s242 = sld [smem:[#allocation3 + $0x2]]
        %v243 = vstv %s242
        %v244 = vmul.f32 %v243, %v241
        %v245 = vadd.f32 %v233, %v244
        %246 = vrot.lane.b32.xlu0 %v210, 1
        %v247 = vpop.permute.xlu0 %246
        %v248 = vrot.slane %v247, 1
        %vm249 = vcmask 7168
        %v250 = vsel %vm249, %v247, %v248
        %v252 = vsel %vm211, %v250, 0.0
        %s253 = sld [smem:[#allocation3 + $0x3]]
        %v254 = vstv %s253
        %v255 = vmul.f32 %v254, %v252
        %v256 = vadd.f32 %v245, %v255
        %v257 = vld [vmem:[#allocation2 + $0x1] sm:$0x3]
        %s258 = sld [smem:[#allocation3 + $0x4]]
        %v259 = vstv %s258
        %v260 = vmul.f32 %v259, %v257
        %v261 = vadd.f32 %v256, %v260
        %v262 = vld [vmem:[#allocation2 + $0x1] sm:$0x7]
        %264 = vrot.lane.b32.xlu0 %v262, 127
        %v265 = vpop.permute.xlu0 %264
        %v266 = vrot.slane %v265, 1
        %vm267 = vcmask 1039360
        %v268 = vsel %vm267, %v265, %v266
        %v270 = vsel %vm234, %v268, 0.0
        %s271 = sld [smem:[#allocation3 + $0x5]]
        %v272 = vstv %s271
        %v273 = vmul.f32 %v272, %v270
        %v274 = vadd.f32 %v261, %v273
        %275 = vrot.lane.b32.xlu0 %v262, 113
        %v276 = vpop.permute.xlu0 %275
        %v277 = vrot.slane %v276, 1
        %vm278 = vcmask 924672
        %v279 = vsel %vm278, %v276, %v277
        %v281 = vsel %vm211, %v279, 0.0
        %s282 = sld [smem:[#allocation3 + $0x6]]
        %v283 = vstv %s282
        %v284 = vmul.f32 %v283, %v281
        %v285 = vadd.f32 %v274, %v284
        %s286 = sld [smem:[#allocation3 + $0x7]]
        %v287 = vstv %s286
        %v288 = vmul.f32 %v287, %v262
        %290 = vrot.lane.b32.xlu0 %v288, 112
        %v291 = vpop.permute.xlu0 %290
        %v292 = vrot.slane %v291, 1
        %vm293 = vcmask 916480
        %v294 = vsel %vm293, %v291, %v292
        %v296 = vadd.f32 %v285, %v294
        %297 = vrot.lane.b32.xlu0 %v262, 111
        %v298 = vpop.permute.xlu0 %297
        %v299 = vrot.slane %v298, 1
        %vm300 = vcmask 908288
        %v301 = vsel %vm300, %v298, %v299
        %v303 = vsel %vm234, %v301, 0.0
        %s304 = sld [smem:[#allocation3 + $0x8]]
        %v305 = vstv %s304
        %v306 = vmul.f32 %v305, %v303
        %v307 = vadd.f32 %v296, %v306
        %308 = vst.msk [vmem:[%s198] sm:$0x3] %vm207, %v307
        %s309 = sand.u32 %s97, 1
        %s310 = scalar_lea.sflag [#allocation5], %s309
        %s311 = sand.u32 %s97, 1
        %s312 = smul.addr %s311, 2
        %s313 = scalar_lea.vmem [#allocation8], %s312
        // Predicated region
        $region41: #{tpu_custom_call.1} parent=31 // pred_check
          %p314 = pneg %p107
        $region42: #{tpu_custom_call.1} parent=31 // pred_check_branch
          %316 = sbr.rel (%p314) target = $region44
        $region43: #{tpu_custom_call.1} parent=31 // pred_region
          %s318 = ssub.s32 32, 32
          %319 = vsyncadd %s310, %s318
          %s320 = smul.addr %s21, 2
          %s321 = smul.addr %s320, 16
          %s322 = scalar_lea.hbm %s3, %s321
          %s324 = sshll.u32 %s313, 4
          %s325 = int_to_ptr.vmem [resolvable:$true] %s324
          %327 = dma.vmem_to_hbm [thread:$0]  %s325, 32, %s322, %s310
        $region44: #{tpu_custom_call.1} parent=31 // pred_fallthru
          _
      $region32: #{tpu_custom_call.1} parent=5 // pred_fallthru
        _
      %p328 = scmp.le.s32.totalorder 2, %s16
      // Predicated region
      $region45: #{tpu_custom_call.1} parent=5 // pred_check
        %p329 = pneg %p328
      $region46: #{tpu_custom_call.1} parent=5 // pred_check_branch
        %331 = sbr.rel (%p329) target = $region48
      $region47: #{tpu_custom_call.1} parent=5 // pred_region
        %s332 = ssub.s32 %s16, 2
        // Predicated region
        $region49: #{tpu_custom_call.1} parent=47 // pred_check
          %p333 = pneg %p113
        $region50: #{tpu_custom_call.1} parent=47 // pred_check_branch
          %335 = sbr.rel (%p333) target = $region52
        $region51: #{tpu_custom_call.1} parent=47 // pred_region
          %s336 = sand.u32 %s98, 1
          %s337 = scalar_lea.sflag [#allocation5], %s336
          %s338 = sand.u32 %s98, 1
          %s339 = smul.addr %s338, 2
          %s340 = scalar_lea.vmem [#allocation8], %s339
          %341 = dma.done %s337, 32
        $region52: #{tpu_custom_call.1} parent=47 // pred_fallthru
          _
      $region48: #{tpu_custom_call.1} parent=5 // pred_fallthru
        _
    $region6: #{tpu_custom_call.1} parent=1 // loop_footer
      %s20 = sadd.s32 1, %s16
    $region7: #{tpu_custom_call.1} parent=1 // loop_footer_branch
      %15 = sbr.rel target = $region3
    $region8: #{tpu_custom_call.1} parent=1 // loop_exit
      _
    %342 = vsyncpa [#allocation4], 1
    %s343 = scalar_lea.sflag [#allocation4], 1
    %344 = vsyncpa %s343, 1
    %345 = vsyncpa [#allocation5], 1
    %s346 = scalar_lea.sflag [#allocation5], 1
    %347 = vsyncpa %s346, 1
    %348 = vsyncpa [#allocation6], 1
    %s349 = scalar_lea.sflag [#allocation6], 1
    %350 = vsyncpa %s349, 1

</llo_original>
